<compile_context>
chip_gen: v6e
topology: v6e:2x2x1
jax: 0.10.0
libtpu: 0.0.40
codegen_flags: <defaults>
</compile_context>

<pallas_src>
import functools

import jax
import jax.numpy as jnp
import numpy as np
from jax.experimental import pallas as pl
from jax.experimental.pallas import tpu as pltpu


@functools.lru_cache(maxsize=None)
def _vmem_capacity_bytes():
    """Per-core VMEM capacity; conservative (v7x = 64 MiB) if query fails."""
    default = 64 * 1024 * 1024
    try:
        info = pltpu.get_tpu_info()
        cap = getattr(info, "vmem_capacity_bytes", None)
        if cap:
            return int(cap)
    except Exception:
        pass
    return default


def _dice_kernel(probs_ref, labels_ref, ratio_ref, num_acc, den_acc, *,
                 smooth, rem, tk, n_spatial):
    """One (row_tile, tk) block; grid dim 1 (spatial) is the reduction axis."""
    p = probs_ref[...].astype(jnp.float32)
    l = labels_ref[...].astype(jnp.float32)

    if n_spatial == 1:
        # Whole spatial extent in a single block (block == full array dim, so
        # no OOB lanes): reduce directly, accumulators unused.
        num = jnp.sum(l * p, axis=-1, keepdims=True)
        den = jnp.sum(l + p * p, axis=-1, keepdims=True)
        ratio_ref[...] = (2.0 * num) / (den + smooth)
        return

    j = pl.program_id(1)
    last = n_spatial - 1
    nk = tk // 128  # tk is a multiple of 128 on the multi-step path

    @pl.when(j == 0)
    def _():
        num_acc[...] = jnp.zeros_like(num_acc)
        den_acc[...] = jnp.zeros_like(den_acc)

    def accumulate(pv, lv):
        # Fold the (row_tile, tk) block into (row_tile, 128) partials with
        # pure VPU adds over aligned 128-lane chunks; dense accumulator RMW.
        pc = pv[:, 0:128]
        lc = lv[:, 0:128]
        num = lc * pc
        den = lc + pc * pc
        for kk in range(1, nk):
            sl = slice(kk * 128, (kk + 1) * 128)
            pc = pv[:, sl]
            lc = lv[:, sl]
            num = num + lc * pc
            den = den + lc + pc * pc
        num_acc[...] += num
        den_acc[...] += den

    if rem:
        # Only the last spatial block is ragged: unmasked fast path for every
        # earlier block, masked accumulate only on the final one.
        @pl.when(j != last)
        def _():
            accumulate(p, l)

        @pl.when(j == last)
        def _():
            col = jax.lax.broadcasted_iota(jnp.int32, p.shape, 1)
            valid = col < rem
            accumulate(jnp.where(valid, p, 0.0), jnp.where(valid, l, 0.0))
    else:
        accumulate(p, l)

    @pl.when(j == last)
    def _():
        num = jnp.sum(num_acc[...], axis=-1, keepdims=True)  # one XLU reduce
        den = jnp.sum(den_acc[...], axis=-1, keepdims=True)
        ratio_ref[...] = (2.0 * num) / (den + smooth)


def _pick_row_tile(rows, align, cap=256):
    """Row-tile: multiple of the sublane packing `align`, dividing `rows`,
    preferring an even number of tiles >= 2 (keeps both v7x TensorCores busy);
    falls back to one full-dim block."""
    if rows % align != 0:
        return rows
    best_even = None
    best_any = None
    rt = align
    while rt <= min(rows // 2, cap):
        if rows % rt == 0:
            best_any = rt
            if (rows // rt) % 2 == 0:
                best_even = rt
        rt += align
    if best_even is not None:
        return best_even
    if best_any is not None:
        return best_any
    return rows


def dice_loss(probs, labels, smooth=1e-6, spatial_tile=8192):
    """Dice loss over [N, C, D, H, W]: reduce (D, H, W), mean over (N, C)."""
    assert probs.shape == labels.shape and probs.ndim == 5
    N, C, D, H, W = probs.shape
    R = N * C
    S = D * H * W

    # Reshape only (layout-preserving): no pad, no dtype cast, no extra HBM pass.
    p2 = probs.reshape(R, S)
    l2 = labels.reshape(R, S)

    p_item = jnp.dtype(p2.dtype).itemsize
    l_item = jnp.dtype(l2.dtype).itemsize
    # Sublane packing of the narrowest dtype: 8 (4B), 16 (2B), 32 (1B).
    row_align = max(32 // p_item, 32 // l_item, 8)

    n_valid_rows = R
    if R % row_align != 0 and R > 1024:
        # Rare fallback: too many rows for a single full-dim block and not
        # sublane aligned -> pad rows once (padded rows yield ratio == 0).
        Rp = (R + row_align - 1) // row_align * row_align
        p2 = jnp.pad(p2, ((0, Rp - R), (0, 0)))
        l2 = jnp.pad(l2, ((0, Rp - R), (0, 0)))
        R = Rp

    row_tile = _pick_row_tile(R, row_align)
    n_row = R // row_tile

    # Generation-aware VMEM sizing.
    vmem_cap = _vmem_capacity_bytes()
    vmem_limit = (vmem_cap * 3) // 4          # 96 MiB on v5e/v6e, 48 MiB on v7x
    input_budget = (vmem_limit * 3) // 4      # 72 MiB on v5e/v6e, 36 MiB on v7x

    # Spatial tile: multiple of 128, sized by the double-buffered input budget
    # (2 arrays x 2 buffers); if S fits a single block, take it whole.
    tk_budget = input_budget // (2 * row_tile * (p_item + l_item))
    tk_cap = max(128, min(int(spatial_tile), (tk_budget // 128) * 128))
    if S <= tk_cap:
        tk, rem = S, 0                        # full-array-dim block: no mask
    else:
        tk = tk_cap
        rem = S % tk
    n_spatial = pl.cdiv(S, tk)

    kernel = functools.partial(
        _dice_kernel, smooth=float(smooth), rem=int(rem), tk=int(tk),
        n_spatial=int(n_spatial))

    ratios = pl.pallas_call(
        kernel,
        out_shape=jax.ShapeDtypeStruct((R, 1), jnp.float32),
        grid_spec=pltpu.PrefetchScalarGridSpec(
            num_scalar_prefetch=0,
            grid=(n_row, n_spatial),
            in_specs=[
                pl.BlockSpec((row_tile, tk), lambda i, j: (i, j)),
                pl.BlockSpec((row_tile, tk), lambda i, j: (i, j)),
            ],
            out_specs=pl.BlockSpec((row_tile, 1), lambda i, j: (i, 0)),
            scratch_shapes=[
                pltpu.VMEM((row_tile, 128), jnp.float32),
                pltpu.VMEM((row_tile, 128), jnp.float32),
            ],
        ),
        compiler_params=pltpu.CompilerParams(
            dimension_semantics=("parallel", "arbitrary"),
            vmem_limit_bytes=int(vmem_limit),
        ),
    )(p2, l2)

    # Tiny second-stage reduction over R = N*C per-row ratios.
    return 1.0 - jnp.sum(ratios) / jnp.float32(n_valid_rows)


def dice_loss_ref(probs, labels, smooth=1e-6):
    probs = probs.astype(jnp.float32)
    labels = labels.astype(jnp.float32)
    numerator = 2.0 * jnp.sum(labels * probs, axis=(2, 3, 4))
    denominator = jnp.sum(labels + probs ** 2, axis=(2, 3, 4)) + smooth
    return 1.0 - jnp.mean(numerator / denominator)


if __name__ == "__main__":
    key = jax.random.PRNGKey(0)

    def run_case(k, shape, p_dtype=jnp.float32, l_dtype=jnp.float32, **kw):
        k1, k2 = jax.random.split(k)
        probs = jax.nn.sigmoid(jax.random.normal(k1, shape, jnp.float32)).astype(p_dtype)
        labels = (jax.random.uniform(k2, shape) > 0.5).astype(l_dtype)
        loss = dice_loss(probs, labels, **kw)
        jax.block_until_ready(loss)
        ref = dice_loss_ref(probs, labels)
        assert np.allclose(np.asarray(loss), np.asarray(ref), rtol=5e-5, atol=1e-6), (
            shape, float(loss), float(ref))

    k1, k2, k3, k4 = jax.random.split(key, 4)
    # Single spatial block, single row tile (direct-reduce path, no scratch use).
    run_case(k1, (2, 4, 8, 16, 16))
    # Ragged spatial dim (S=405, tk=256): multi-step, mask only on last block.
    run_case(k2, (2, 4, 5, 9, 9), spatial_tile=256)
    # bf16 probs: 16-row packed block, 4 unmasked spatial steps.
    run_case(k3, (4, 4, 8, 16, 16), p_dtype=jnp.bfloat16, spatial_tile=512)
    # Even row split (n_row=2, "parallel" axis) + multi-step spatial accumulate.
    run_case(k4, (8, 8, 4, 16, 16), spatial_tile=512)

    print("KERNEL_OK")
</pallas_src>

<mosaic_0001>
module attributes {stable_mosaic.version = 11 : i64} {
  func.func @_dice_kernel(%arg0: i32, %arg1: i32, %arg2: memref<8x2048xf32, #tpu.memory_space<vmem>>, %arg3: memref<8x2048xf32, #tpu.memory_space<vmem>>, %arg4: memref<8x1xf32, #tpu.memory_space<vmem>>, %arg5: memref<8x128xf32, #tpu.memory_space<vmem>>, %arg6: memref<8x128xf32, #tpu.memory_space<vmem>>) attributes {dimension_semantics = [#tpu.dimension_semantics<parallel>, #tpu.dimension_semantics<arbitrary>], iteration_bounds = array<i64: 1, 1>, scalar_prefetch = 0 : i64, scratch_operands = 2 : i64, tpu.core_type = #tpu.core_type<tc>, window_params = [{transform_indices = @transform_0, window_bounds = array<i64: 8, 2048>}, {transform_indices = @transform_1, window_bounds = array<i64: 8, 2048>}, {transform_indices = @transform_2, window_bounds = array<i64: 8, 1>}]} {
    %c0 = arith.constant 0 : index
    %c0_0 = arith.constant 0 : index
    %0 = vector.load %arg2[%c0, %c0_0] : memref<8x2048xf32, #tpu.memory_space<vmem>>, vector<8x2048xf32>
    %c0_1 = arith.constant 0 : index
    %c0_2 = arith.constant 0 : index
    %1 = vector.load %arg3[%c0_1, %c0_2] : memref<8x2048xf32, #tpu.memory_space<vmem>>, vector<8x2048xf32>
    %2 = arith.mulf %1, %0 : vector<8x2048xf32>
    %cst = arith.constant dense<0.000000e+00> : vector<8xf32>
    %3 = vector.multi_reduction <add>, %2, %cst [1] : vector<8x2048xf32> to vector<8xf32>
    %4 = vector.shape_cast %3 : vector<8xf32> to vector<8x1xf32>
    %5 = arith.mulf %0, %0 : vector<8x2048xf32>
    %6 = arith.addf %1, %5 : vector<8x2048xf32>
    %cst_3 = arith.constant dense<0.000000e+00> : vector<8xf32>
    %7 = vector.multi_reduction <add>, %6, %cst_3 [1] : vector<8x2048xf32> to vector<8xf32>
    %8 = vector.shape_cast %7 : vector<8xf32> to vector<8x1xf32>
    %cst_4 = arith.constant 2.000000e+00 : f32
    %9 = vector.broadcast %cst_4 : f32 to vector<8x1xf32>
    %10 = arith.mulf %9, %4 : vector<8x1xf32>
    %cst_5 = arith.constant 9.99999997E-7 : f32
    %11 = vector.broadcast %cst_5 : f32 to vector<8x1xf32>
    %12 = arith.addf %8, %11 : vector<8x1xf32>
    %13 = arith.divf %10, %12 : vector<8x1xf32>
    %c0_6 = arith.constant 0 : index
    %c0_7 = arith.constant 0 : index
    %14 = vector.load %arg4[%c0_6, %c0_7] : memref<8x1xf32, #tpu.memory_space<vmem>>, vector<8x1xf32>
    tpu.vector_store %arg4[%c0_6, %c0_7], %13 {strides = array<i32>} : memref<8x1xf32, #tpu.memory_space<vmem>>, vector<8x1xf32>,
    return
  }
  func.func @transform_0(%arg0: i32, %arg1: i32) -> (i32, i32) {
    %c0_i32 = arith.constant 0 : i32
    return %arg0, %arg1 : i32, i32
  }
  func.func @transform_1(%arg0: i32, %arg1: i32) -> (i32, i32) {
    %c0_i32 = arith.constant 0 : i32
    return %arg0, %arg1 : i32, i32
  }
  func.func @transform_2(%arg0: i32, %arg1: i32) -> (i32, i32) {
    %c0_i32 = arith.constant 0 : i32
    %c0_i32_0 = arith.constant 0 : i32
    return %arg0, %c0_i32 : i32, i32
  }
}

</mosaic_0001>

<llo_original>
// kernel: tpu_custom_call.1
$region0: #{tpu_custom_call.1}
  #allocation0 [shape = 'u32[]', space=smem, size = 0x4, offset = 0x4, fixed_abs, tag = 'smem constant byte address 0x4 - core index']
  #allocation1 [shape = 'u32[144,128]{1,0:T(1,128)}', space=vmem, size = 0x12000, scoped, tag = 'internal scratch']
  #allocation2 [shape = 'f32[8,128]{1,0:T(8,128)}', space=vmem, size = 0x1000, scoped, tag = 'scratch operand']
  #allocation3 [shape = 'f32[8,128]{1,0:T(8,128)}', space=vmem, size = 0x1000, scoped, tag = 'scratch operand']
  %s0 = inlined_call_operand.hbm [shape: f32[8,2048], index: 0, kind: input, shape index: {}]
  %s1 = inlined_call_operand.hbm [shape: f32[8,2048], index: 1, kind: input, shape index: {}]
  %s2 = inlined_call_operand.vmem [shape: f32[8,1], index: 2, kind: output, shape index: {}]
  %s3 = sld [smem:[#allocation0]]
  $region26: #{tpu_custom_call.1} parent=0
    _
  %s5 = ssub.s32 1, %s3
  %s6 = scalar_select 0, %s5, %s3
  $region1: #{tpu_custom_call.1} parent=0
    #allocation4 [shape = 'u8[65536]{0}', space=vmem, size = 0x10000, scoped, tag = 'input window, operand 0, single buffered']
    #allocation5 [shape = 's32[1]{0}', space=sflag, size = 0x4, scoped, tag = 'scoped memory for tpu_custom_call.1']
    #allocation6 [shape = 'u8[65536]{0}', space=vmem, size = 0x10000, scoped, tag = 'input window, operand 1, single buffered']
    #allocation7 [shape = 's32[1]{0}', space=sflag, size = 0x4, scoped, tag = 'scoped memory for tpu_custom_call.1']
    %7 = vsyncpa [#allocation5], 0
    %8 = vsyncpa [#allocation7], 0
    // Predicated region
    $region2: #{tpu_custom_call.1} parent=1 // pred_check
      _
    $region3: #{tpu_custom_call.1} parent=1 // pred_check_branch
      %10 = sbr.rel (0) target = $region5
    $region4: #{tpu_custom_call.1} parent=1 // pred_region
      %s12 = ssub.s32 2048, 2048
      %13 = vsyncadd [#allocation5], %s12
      %s15 = sshll.u32 [#allocation4], 4
      %s16 = int_to_ptr.vmem [resolvable:$true] %s15
      %18 = dma.hbm_to_vmem [thread:$0]  %s0, 2048, %s16, [#allocation5]
    $region5: #{tpu_custom_call.1} parent=1 // pred_fallthru
      _
    // Predicated region
    $region6: #{tpu_custom_call.1} parent=1 // pred_check
      _
    $region7: #{tpu_custom_call.1} parent=1 // pred_check_branch
      %20 = sbr.rel (0) target = $region9
    $region8: #{tpu_custom_call.1} parent=1 // pred_region
      %s22 = ssub.s32 2048, 2048
      %23 = vsyncadd [#allocation7], %s22
      %s25 = sshll.u32 [#allocation6], 4
      %s26 = int_to_ptr.vmem [resolvable:$true] %s25
      %28 = dma.hbm_to_vmem [thread:$0]  %s1, 2048, %s26, [#allocation7]
    $region9: #{tpu_custom_call.1} parent=1 // pred_fallthru
      _
    // Predicated region
    $region10: #{tpu_custom_call.1} parent=1 // pred_check
      _
    $region11: #{tpu_custom_call.1} parent=1 // pred_check_branch
      %30 = sbr.rel (0) target = $region13
    $region12: #{tpu_custom_call.1} parent=1 // pred_region
      %31 = dma.done [#allocation5], 2048
    $region13: #{tpu_custom_call.1} parent=1 // pred_fallthru
      _
    // Predicated region
    $region14: #{tpu_custom_call.1} parent=1 // pred_check
      _
    $region15: #{tpu_custom_call.1} parent=1 // pred_check_branch
      %33 = sbr.rel (0) target = $region17
    $region16: #{tpu_custom_call.1} parent=1 // pred_region
      %34 = dma.done [#allocation7], 2048
    $region17: #{tpu_custom_call.1} parent=1 // pred_fallthru
      _
    %v35 = vld [vmem:[#allocation4] sm:$0xff]
    %v36 = vld [vmem:[#allocation4 + $0x8] sm:$0xff]
    %v37 = vld [vmem:[#allocation4 + $0x10] sm:$0xff]
    %v38 = vld [vmem:[#allocation4 + $0x18] sm:$0xff]
    %v39 = vld [vmem:[#allocation4 + $0x20] sm:$0xff]
    %v40 = vld [vmem:[#allocation4 + $0x28] sm:$0xff]
    %v41 = vld [vmem:[#allocation4 + $0x30] sm:$0xff]
    %v42 = vld [vmem:[#allocation4 + $0x38] sm:$0xff]
    %v43 = vld [vmem:[#allocation4 + $0x40] sm:$0xff]
    %v44 = vld [vmem:[#allocation4 + $0x48] sm:$0xff]
    %v45 = vld [vmem:[#allocation4 + $0x50] sm:$0xff]
    %v46 = vld [vmem:[#allocation4 + $0x58] sm:$0xff]
    %v47 = vld [vmem:[#allocation4 + $0x60] sm:$0xff]
    %v48 = vld [vmem:[#allocation4 + $0x68] sm:$0xff]
    %v49 = vld [vmem:[#allocation4 + $0x70] sm:$0xff]
    %v50 = vld [vmem:[#allocation4 + $0x78] sm:$0xff]
    %v51 = vld [vmem:[#allocation6] sm:$0xff]
    %v52 = vld [vmem:[#allocation6 + $0x8] sm:$0xff]
    %v53 = vld [vmem:[#allocation6 + $0x10] sm:$0xff]
    %v54 = vld [vmem:[#allocation6 + $0x18] sm:$0xff]
    %v55 = vld [vmem:[#allocation6 + $0x20] sm:$0xff]
    %v56 = vld [vmem:[#allocation6 + $0x28] sm:$0xff]
    %v57 = vld [vmem:[#allocation6 + $0x30] sm:$0xff]
    %v58 = vld [vmem:[#allocation6 + $0x38] sm:$0xff]
    %v59 = vld [vmem:[#allocation6 + $0x40] sm:$0xff]
    %v60 = vld [vmem:[#allocation6 + $0x48] sm:$0xff]
    %v61 = vld [vmem:[#allocation6 + $0x50] sm:$0xff]
    %v62 = vld [vmem:[#allocation6 + $0x58] sm:$0xff]
    %v63 = vld [vmem:[#allocation6 + $0x60] sm:$0xff]
    %v64 = vld [vmem:[#allocation6 + $0x68] sm:$0xff]
    %v65 = vld [vmem:[#allocation6 + $0x70] sm:$0xff]
    %v66 = vld [vmem:[#allocation6 + $0x78] sm:$0xff]
    %v67 = vmul.f32 %v51, %v35
    %v68 = vmul.f32 %v52, %v36
    %v69 = vmul.f32 %v53, %v37
    %v70 = vmul.f32 %v54, %v38
    %v71 = vmul.f32 %v55, %v39
    %v72 = vmul.f32 %v56, %v40
    %v73 = vmul.f32 %v57, %v41
    %v74 = vmul.f32 %v58, %v42
    %v75 = vmul.f32 %v59, %v43
    %v76 = vmul.f32 %v60, %v44
    %v77 = vmul.f32 %v61, %v45
    %v78 = vmul.f32 %v62, %v46
    %v79 = vmul.f32 %v63, %v47
    %v80 = vmul.f32 %v64, %v48
    %v81 = vmul.f32 %v65, %v49
    %v82 = vmul.f32 %v66, %v50
    %v83 = vadd.f32 %v67, %v68
    %v84 = vadd.f32 %v83, %v69
    %v85 = vadd.f32 %v84, %v70
    %v86 = vadd.f32 %v85, %v71
    %v87 = vadd.f32 %v86, %v72
    %v88 = vadd.f32 %v87, %v73
    %v89 = vadd.f32 %v88, %v74
    %v90 = vadd.f32 %v89, %v75
    %v91 = vadd.f32 %v90, %v76
    %v92 = vadd.f32 %v91, %v77
    %v93 = vadd.f32 %v92, %v78
    %v94 = vadd.f32 %v93, %v79
    %v95 = vadd.f32 %v94, %v80
    %v96 = vadd.f32 %v95, %v81
    %v97 = vadd.f32 %v96, %v82
    %98 = vadd.xlane.f32.xlu0 %v97
    %v99 = vpop.xlane.xlu0 %98
    %v100 = vmul.f32 %v35, %v35
    %v101 = vmul.f32 %v36, %v36
    %v102 = vmul.f32 %v37, %v37
    %v103 = vmul.f32 %v38, %v38
    %v104 = vmul.f32 %v39, %v39
    %v105 = vmul.f32 %v40, %v40
    %v106 = vmul.f32 %v41, %v41
    %v107 = vmul.f32 %v42, %v42
    %v108 = vmul.f32 %v43, %v43
    %v109 = vmul.f32 %v44, %v44
    %v110 = vmul.f32 %v45, %v45
    %v111 = vmul.f32 %v46, %v46
    %v112 = vmul.f32 %v47, %v47
    %v113 = vmul.f32 %v48, %v48
    %v114 = vmul.f32 %v49, %v49
    %v115 = vmul.f32 %v50, %v50
    %v116 = vadd.f32 %v51, %v100
    %v117 = vadd.f32 %v52, %v101
    %v118 = vadd.f32 %v53, %v102
    %v119 = vadd.f32 %v54, %v103
    %v120 = vadd.f32 %v55, %v104
    %v121 = vadd.f32 %v56, %v105
    %v122 = vadd.f32 %v57, %v106
    %v123 = vadd.f32 %v58, %v107
    %v124 = vadd.f32 %v59, %v108
    %v125 = vadd.f32 %v60, %v109
    %v126 = vadd.f32 %v61, %v110
    %v127 = vadd.f32 %v62, %v111
    %v128 = vadd.f32 %v63, %v112
    %v129 = vadd.f32 %v64, %v113
    %v130 = vadd.f32 %v65, %v114
    %v131 = vadd.f32 %v66, %v115
    %v132 = vadd.f32 %v116, %v117
    %v133 = vadd.f32 %v132, %v118
    %v134 = vadd.f32 %v133, %v119
    %v135 = vadd.f32 %v134, %v120
    %v136 = vadd.f32 %v135, %v121
    %v137 = vadd.f32 %v136, %v122
    %v138 = vadd.f32 %v137, %v123
    %v139 = vadd.f32 %v138, %v124
    %v140 = vadd.f32 %v139, %v125
    %v141 = vadd.f32 %v140, %v126
    %v142 = vadd.f32 %v141, %v127
    %v143 = vadd.f32 %v142, %v128
    %v144 = vadd.f32 %v143, %v129
    %v145 = vadd.f32 %v144, %v130
    %v146 = vadd.f32 %v145, %v131
    %147 = vadd.xlane.f32.xlu0 %v146
    %v148 = vpop.xlane.xlu0 %147
    %v149 = vmul.f32 %v99, 2.0
    %v150 = vadd.f32 %v148, 1e-06
    %v151 = vrcp.pop %v150
    %v152 = vmul.f32 %v149, %v151
    %vm153 = vcmask 7168
    %154 = vst.msk [vmem:[%s2] sm:$0xff] %vm153, %v152
    // Predicated region
    $region18: #{tpu_custom_call.1} parent=1 // pred_check
      _
    $region19: #{tpu_custom_call.1} parent=1 // pred_check_branch
      %156 = sbr.rel (0) target = $region21
    $region20: #{tpu_custom_call.1} parent=1 // pred_region
      _
    $region21: #{tpu_custom_call.1} parent=1 // pred_fallthru
      _
    // Predicated region
    $region22: #{tpu_custom_call.1} parent=1 // pred_check
      _
    $region23: #{tpu_custom_call.1} parent=1 // pred_check_branch
      %158 = sbr.rel (0) target = $region25
    $region24: #{tpu_custom_call.1} parent=1 // pred_region
      _
    $region25: #{tpu_custom_call.1} parent=1 // pred_fallthru
      _
    %159 = vsyncpa [#allocation5], 1
    %160 = vsyncpa [#allocation7], 1

</llo_original>
